<compile_context>
chip_gen: v7x
topology: tpu7x:2x2x1
jax: 0.10.0
libtpu: 0.0.40
codegen_flags: <defaults>
</compile_context>

<pallas_src>
import functools
import math

import jax
import jax.numpy as jnp
from jax.experimental import pallas as pl
from jax.experimental.pallas import tpu as pltpu


# ----------------------------- configuration -------------------------------
EMBED_DIMS = (32, 64, 96, 128)     # small, divisible by num_heads
NUM_HEADS = (1, 2, 4, 8)
SR_RATIOS = (8, 4, 2, 1)
PATCH = (7, 3, 3, 3)
STRIDE = (4, 2, 2, 2)
CROSS = ((False, False, True), (False, False, True),
         (False, True, True), (False, True, True))
DEPTHS = 3

ACT_DT = jnp.bfloat16                 # internal activation dtype (MXU-native)
VMEM_LIMIT = 32 * 1024 * 1024         # safe on v5e/v6e/v7x


# ----------------------------- tiling helpers ------------------------------
def _row_plan(M):
    """Row tile and (possibly padded) row count for a (M, K) operand."""
    for cand in (512, 256, 128, 64, 32, 16, 8):
        if M % cand == 0:
            return cand, M
    if M > 256:
        return 256, ((M + 255) // 256) * 256
    return M, M                        # tiny M: full block (equals array dim)


def _seq_tile(N):
    for cand in (256, 128, 64, 32, 16, 8):
        if N % cand == 0:
            return cand
    return N


def _h_tile(H):
    for cand in (64, 32, 16, 8):
        if H % cand == 0:
            return cand
    return H


def _pad_rows(x, M_pad):
    M = x.shape[0]
    return x if M_pad == M else jnp.pad(x, ((0, M_pad - M), (0, 0)))


# --------------------- matmul (optional fused LayerNorm) -------------------
def _mm_kernel(a_ref, b_ref, bias_ref, g_ref, bt_ref, o_ref, *, mode, eps):
    a = a_ref[...]
    if mode == "ln":                     # fold the preceding LayerNorm in
        af = a.astype(jnp.float32)
        mu = jnp.mean(af, axis=-1, keepdims=True)
        var = jnp.mean((af - mu) ** 2, axis=-1, keepdims=True)
        af = (af - mu) * jax.lax.rsqrt(var + eps) * g_ref[...] + bt_ref[...]
        a = af.astype(ACT_DT)
    acc = jnp.dot(a, b_ref[...], preferred_element_type=jnp.float32)
    o_ref[...] = (acc + bias_ref[...]).astype(o_ref.dtype)


@functools.lru_cache(maxsize=None)
def _matmul_call(M, K, N, tm, mode, eps, out_dtype):
    return jax.jit(pl.pallas_call(
        functools.partial(_mm_kernel, mode=mode, eps=eps),
        grid=(M // tm,),
        in_specs=[pl.BlockSpec((tm, K), lambda i: (i, 0)),
                  pl.BlockSpec((K, N), lambda i: (0, 0)),
                  pl.BlockSpec((1, N), lambda i: (0, 0)),
                  pl.BlockSpec((1, K), lambda i: (0, 0)),
                  pl.BlockSpec((1, K), lambda i: (0, 0))],
        out_specs=pl.BlockSpec((tm, N), lambda i: (i, 0)),
        out_shape=jax.ShapeDtypeStruct((M, N), out_dtype),
        compiler_params=pltpu.CompilerParams(
            dimension_semantics=("parallel",),
            vmem_limit_bytes=VMEM_LIMIT),
    ))


def pallas_matmul(a, b, bias=None, *, ln_gamma=None, ln_beta=None,
                  ln_eps=1e-6, out_dtype=ACT_DT):
    """out = [LayerNorm(a)] @ b + bias   (bf16 MXU operands, f32 accumulate)."""
    M, K = a.shape
    N = b.shape[1]
    mode = "ln" if ln_gamma is not None else "none"
    if bias is None:
        bias = jnp.zeros((N,), jnp.float32)
    if ln_gamma is None:
        ln_gamma = jnp.ones((K,), jnp.float32)
        ln_beta = jnp.zeros((K,), jnp.float32)
    tm, M_pad = _row_plan(M)
    a = _pad_rows(a.astype(ACT_DT), M_pad)
    out = _matmul_call(M_pad, K, N, tm, mode, float(ln_eps), out_dtype)(
        a, b.astype(ACT_DT),
        bias.reshape(1, N).astype(jnp.float32),
        ln_gamma.reshape(1, K).astype(jnp.float32),
        ln_beta.reshape(1, K).astype(jnp.float32))
    return out[:M] if M_pad != M else out


# ------------------------------ LayerNorm ----------------------------------
def _ln_kernel(x_ref, g_ref, b_ref, o_ref, *, eps):
    x = x_ref[...].astype(jnp.float32)
    mu = jnp.mean(x, axis=-1, keepdims=True)
    var = jnp.mean((x - mu) ** 2, axis=-1, keepdims=True)
    o_ref[...] = ((x - mu) * jax.lax.rsqrt(var + eps) * g_ref[...]
                  + b_ref[...]).astype(o_ref.dtype)


@functools.lru_cache(maxsize=None)
def _ln_call(M, C, tm, eps):
    return jax.jit(pl.pallas_call(
        functools.partial(_ln_kernel, eps=eps),
        grid=(M // tm,),
        in_specs=[pl.BlockSpec((tm, C), lambda i: (i, 0)),
                  pl.BlockSpec((1, C), lambda i: (0, 0)),
                  pl.BlockSpec((1, C), lambda i: (0, 0))],
        out_specs=pl.BlockSpec((tm, C), lambda i: (i, 0)),
        out_shape=jax.ShapeDtypeStruct((M, C), ACT_DT),
        compiler_params=pltpu.CompilerParams(
            dimension_semantics=("parallel",),
            vmem_limit_bytes=VMEM_LIMIT),
    ))


def pallas_layernorm(x2d, gamma, beta, eps):
    M, C = x2d.shape
    tm, M_pad = _row_plan(M)
    x = _pad_rows(x2d.astype(ACT_DT), M_pad)
    out = _ln_call(M_pad, C, tm, float(eps))(
        x, gamma.reshape(1, C).astype(jnp.float32),
        beta.reshape(1, C).astype(jnp.float32))
    return out[:M] if M_pad != M else out


# ---------------------- BatchNorm (2-pass) + LeakyReLU ---------------------
def _bn_stats_kernel(x_ref, s_ref):
    @pl.when(pl.program_id(0) == 0)
    def _():
        s_ref[...] = jnp.zeros_like(s_ref)
    x = x_ref[...].astype(jnp.float32)
    upd = jnp.concatenate([jnp.sum(x, axis=0, keepdims=True),
                           jnp.sum(x * x, axis=0, keepdims=True)], axis=0)
    s_ref[...] += upd


@functools.lru_cache(maxsize=None)
def _bn_stats_call(M, C, tm):
    return jax.jit(pl.pallas_call(
        _bn_stats_kernel,
        grid=(M // tm,),
        in_specs=[pl.BlockSpec((tm, C), lambda i: (i, 0))],
        out_specs=pl.BlockSpec((2, C), lambda i: (0, 0)),
        out_shape=jax.ShapeDtypeStruct((2, C), jnp.float32),
        compiler_params=pltpu.CompilerParams(
            dimension_semantics=("arbitrary",),
            vmem_limit_bytes=VMEM_LIMIT),
    ))


def pallas_bn_stats(rows):
    M, C = rows.shape
    tm, M_pad = _row_plan(M)
    r = _pad_rows(rows.astype(ACT_DT), M_pad)   # zero rows do not bias sums
    return _bn_stats_call(M_pad, C, tm)(r)


def _bn_apply_kernel(x_ref, s_ref, t_ref, o_ref):
    x = x_ref[...].astype(jnp.float32)
    y = x * s_ref[...] + t_ref[...]
    o_ref[...] = jnp.where(y >= 0, y, y * 0.01).astype(o_ref.dtype)  # LeakyReLU


@functools.lru_cache(maxsize=None)
def _bn_apply_call(M, C, tm):
    return jax.jit(pl.pallas_call(
        _bn_apply_kernel,
        grid=(M // tm,),
        in_specs=[pl.BlockSpec((tm, C), lambda i: (i, 0)),
                  pl.BlockSpec((1, C), lambda i: (0, 0)),
                  pl.BlockSpec((1, C), lambda i: (0, 0))],
        out_specs=pl.BlockSpec((tm, C), lambda i: (i, 0)),
        out_shape=jax.ShapeDtypeStruct((M, C), ACT_DT),
        compiler_params=pltpu.CompilerParams(
            dimension_semantics=("parallel",),
            vmem_limit_bytes=VMEM_LIMIT),
    ))


def pallas_bn_apply(rows, scale, shift):
    M, C = rows.shape
    tm, M_pad = _row_plan(M)
    r = _pad_rows(rows.astype(ACT_DT), M_pad)
    out = _bn_apply_call(M_pad, C, tm)(
        r, scale.reshape(1, C).astype(jnp.float32),
        shift.reshape(1, C).astype(jnp.float32))
    return out[:M] if M_pad != M else out


# ------------------------------- attention ---------------------------------
def _attn_kernel(q_ref, k_ref, v_ref, o_ref, *, scale):
    q = q_ref[0]                                      # (heads, tq, d) bf16
    k = k_ref[0]                                      # (heads, Nk, d) bf16
    v = v_ref[0]
    s = jnp.einsum("hqd,hkd->hqk", q, k,
                   preferred_element_type=jnp.float32) * scale
    s = s - jnp.max(s, axis=-1, keepdims=True)
    p = jnp.exp(s)
    p = p * pl.reciprocal(jnp.sum(p, axis=-1, keepdims=True), approx=True)
    o = jnp.einsum("hqk,hkd->hqd", p.astype(v.dtype), v,
                   preferred_element_type=jnp.float32)
    o_ref[0] = o.astype(o_ref.dtype)


@functools.lru_cache(maxsize=None)
def _attn_call(B, heads, Nq, Nk, d, tq, scale):
    return jax.jit(pl.pallas_call(
        functools.partial(_attn_kernel, scale=scale),
        grid=(B, Nq // tq),
        in_specs=[pl.BlockSpec((1, heads, tq, d), lambda b, i: (b, 0, i, 0)),
                  pl.BlockSpec((1, heads, Nk, d), lambda b, i: (b, 0, 0, 0)),
                  pl.BlockSpec((1, heads, Nk, d), lambda b, i: (b, 0, 0, 0))],
        out_specs=pl.BlockSpec((1, heads, tq, d), lambda b, i: (b, 0, i, 0)),
        out_shape=jax.ShapeDtypeStruct((B, heads, Nq, d), ACT_DT),
        compiler_params=pltpu.CompilerParams(
            dimension_semantics=("parallel", "parallel"),
            vmem_limit_bytes=VMEM_LIMIT),
    ))


def pallas_attention(q, k, v, scale):
    B, heads, Nq, d = q.shape
    Nk = k.shape[2]
    tq = _seq_tile(Nq)
    return _attn_call(B, heads, Nq, Nk, d, tq, float(scale))(
        q.astype(ACT_DT), k.astype(ACT_DT), v.astype(ACT_DT))


# ------------------ depthwise 3x3 conv (+ fused epilogues) -----------------
def _dw_accum(top_ref, mid_ref, bot_ref, w_ref, shp):
    Wd = shp[1]
    acc = jnp.zeros(shp, jnp.float32)
    rows = (top_ref[0], mid_ref[0], bot_ref[0])       # each (th, W+2, C)
    for t in range(3):
        r = rows[t].astype(jnp.float32)
        for dj in range(3):
            acc = acc + r[:, dj:dj + Wd, :] * w_ref[3 * t + dj].astype(jnp.float32)
    return acc


def _dwconv_gelu_kernel(top_ref, mid_ref, bot_ref, w_ref, b_ref, o_ref):
    shp = o_ref.shape[1:]
    acc = _dw_accum(top_ref, mid_ref, bot_ref, w_ref, shp)
    acc = acc + b_ref[...].astype(jnp.float32)
    # TODO(synk): PyTorch nn.GELU default is exact erf; tanh approximation used
    # here since erf has no guaranteed Mosaic lowering.
    c0 = math.sqrt(2.0 / math.pi)
    acc = 0.5 * acc * (1.0 + jnp.tanh(c0 * (acc + 0.044715 * acc * acc * acc)))
    o_ref[0] = acc.astype(o_ref.dtype)


def _pos_ln_kernel(top_ref, mid_ref, bot_ref, w_ref, b_ref, g_ref, bt_ref,
                   o_ref, *, eps):
    shp = o_ref.shape[1:]
    Wd = shp[1]
    acc = _dw_accum(top_ref, mid_ref, bot_ref, w_ref, shp)
    acc = acc + b_ref[...].astype(jnp.float32)
    center = mid_ref[0][:, 1:1 + Wd, :].astype(jnp.float32)
    y = center * jax.nn.sigmoid(acc)                  # positional gate
    mu = jnp.mean(y, axis=-1, keepdims=True)          # fused patch-embed LN
    var = jnp.mean((y - mu) ** 2, axis=-1, keepdims=True)
    o_ref[0] = ((y - mu) * jax.lax.rsqrt(var + eps) * g_ref[...]
                + bt_ref[...]).astype(o_ref.dtype)


@functools.lru_cache(maxsize=None)
def _dwconv_call(B, H, W, C, th):
    Wp = W + 2
    return jax.jit(pl.pallas_call(
        _dwconv_gelu_kernel,
        grid=(B, H // th),
        in_specs=[pl.BlockSpec((1, th, Wp, C), lambda b, i: (b, i, 0, 0)),
                  pl.BlockSpec((1, th, Wp, C), lambda b, i: (b, i, 0, 0)),
                  pl.BlockSpec((1, th, Wp, C), lambda b, i: (b, i, 0, 0)),
                  pl.BlockSpec((9, 1, C), lambda b, i: (0, 0, 0)),
                  pl.BlockSpec((1, C), lambda b, i: (0, 0))],
        out_specs=pl.BlockSpec((1, th, W, C), lambda b, i: (b, i, 0, 0)),
        out_shape=jax.ShapeDtypeStruct((B, H, W, C), ACT_DT),
        compiler_params=pltpu.CompilerParams(
            dimension_semantics=("parallel", "parallel"),
            vmem_limit_bytes=VMEM_LIMIT),
    ))


@functools.lru_cache(maxsize=None)
def _pos_call(B, H, W, C, th, eps):
    Wp = W + 2
    return jax.jit(pl.pallas_call(
        functools.partial(_pos_ln_kernel, eps=eps),
        grid=(B, H // th),
        in_specs=[pl.BlockSpec((1, th, Wp, C), lambda b, i: (b, i, 0, 0)),
                  pl.BlockSpec((1, th, Wp, C), lambda b, i: (b, i, 0, 0)),
                  pl.BlockSpec((1, th, Wp, C), lambda b, i: (b, i, 0, 0)),
                  pl.BlockSpec((9, 1, C), lambda b, i: (0, 0, 0)),
                  pl.BlockSpec((1, C), lambda b, i: (0, 0)),
                  pl.BlockSpec((1, C), lambda b, i: (0, 0)),
                  pl.BlockSpec((1, C), lambda b, i: (0, 0))],
        out_specs=pl.BlockSpec((1, th, W, C), lambda b, i: (b, i, 0, 0)),
        out_shape=jax.ShapeDtypeStruct((B, H, W, C), ACT_DT),
        compiler_params=pltpu.CompilerParams(
            dimension_semantics=("parallel", "parallel"),
            vmem_limit_bytes=VMEM_LIMIT),
    ))


def _dw_views(x_nhwc):
    B, H, W, C = x_nhwc.shape
    xp = jnp.pad(x_nhwc, ((0, 0), (1, 1), (1, 1), (0, 0)))
    return xp[:, 0:H], xp[:, 1:H + 1], xp[:, 2:H + 2]   # 1-row-halo shifted views


def _dw_weight(w):
    C = w.shape[0]
    return jnp.transpose(w.reshape(C, 9), (1, 0)).reshape(9, 1, C).astype(jnp.float32)


def pallas_dwconv_gelu(x_nhwc, w, b):
    B, H, W, C = x_nhwc.shape
    th = _h_tile(H)
    top, mid, bot = _dw_views(x_nhwc.astype(ACT_DT))
    return _dwconv_call(B, H, W, C, th)(
        top, mid, bot, _dw_weight(w), b.reshape(1, C).astype(jnp.float32))


def pallas_pos_ln(x_nhwc, w, b, gamma, beta, eps=1e-5):
    B, H, W, C = x_nhwc.shape
    th = _h_tile(H)
    top, mid, bot = _dw_views(x_nhwc.astype(ACT_DT))
    return _pos_call(B, H, W, C, th, float(eps))(
        top, mid, bot, _dw_weight(w), b.reshape(1, C).astype(jnp.float32),
        gamma.reshape(1, C).astype(jnp.float32),
        beta.reshape(1, C).astype(jnp.float32))


# ----------------------------- conv glue (NHWC) -----------------------------
def _im2col_nhwc(x, kh, kw, stride, pad):
    B, H, W, C = x.shape
    xp = jnp.pad(x, ((0, 0), (pad, pad), (pad, pad), (0, 0)))
    Ho = (H + 2 * pad - kh) // stride + 1
    Wo = (W + 2 * pad - kw) // stride + 1
    cols = [xp[:, i:i + stride * Ho:stride, j:j + stride * Wo:stride, :]
            for i in range(kh) for j in range(kw)]
    cols = jnp.concatenate(cols, axis=-1)            # (B, Ho, Wo, kh*kw*C)
    return cols.reshape(B * Ho * Wo, kh * kw * C), Ho, Wo


def _conv_weight_matrix(w):
    # (Cout, Cin, kh, kw) -> (kh*kw*Cin, Cout), tap-major / channel-fast rows
    Cout, Cin, kh, kw = w.shape
    return w.transpose(2, 3, 1, 0).reshape(kh * kw * Cin, Cout)


def conv2d_nhwc(x, w, b, stride, pad):
    cols, Ho, Wo = _im2col_nhwc(x, w.shape[2], w.shape[3], stride, pad)
    return pallas_matmul(cols, _conv_weight_matrix(w), b), Ho, Wo


def conv1x1_nhwc(x, w):
    B, H, W, C = x.shape
    Cout = w.shape[0]
    y = pallas_matmul(x.reshape(B * H * W, C), w.reshape(Cout, C).T)
    return y.reshape(B, H, W, Cout)


def _interp_matrix(src, dst):
    # bilinear, align_corners=True
    rows = [[0.0] * dst for _ in range(src)]
    for i in range(dst):
        coord = (i * (src - 1) / (dst - 1)) if dst > 1 else 0.0
        lo = min(int(math.floor(coord)), src - 1)
        hi = min(lo + 1, src - 1)
        frac = coord - lo
        rows[lo][i] += 1.0 - frac
        rows[hi][i] += frac
    return jnp.asarray(rows, jnp.float32)            # (src, dst)


def bilinear_upsample_nhwc(x, Ho, Wo):
    B, H, W, C = x.shape
    Mh = _interp_matrix(H, Ho).T                     # (Ho, H)
    Mw = _interp_matrix(W, Wo)                       # (W, Wo)
    outs = []
    for b in range(B):
        xb = x[b]                                    # (H, W, C)
        y = pallas_matmul(Mh, xb.reshape(H, W * C))  # (Ho, W*C)
        y = y.reshape(Ho, W, C).transpose(0, 2, 1).reshape(Ho * C, W)
        z = pallas_matmul(y, Mw)                     # (Ho*C, Wo)
        outs.append(z.reshape(Ho, C, Wo).transpose(0, 2, 1))
    return jnp.stack(outs, axis=0)                   # (B, Ho, Wo, C)


# ----------------------------- model forward -------------------------------
def patch_embed_forward(p, x_nhwc, patch, stride):
    B = x_nhwc.shape[0]
    y, Ho, Wo = conv2d_nhwc(x_nhwc, p['proj_w'], p['proj_b'], stride, patch // 2)
    C = p['proj_w'].shape[0]
    y = pallas_pos_ln(y.reshape(B, Ho, Wo, C), p['pa_w'], p['pa_b'],
                      p['norm_g'], p['norm_b'], eps=1e-5)
    return y.reshape(B, Ho * Wo, C), Ho, Wo


def attention_forward(p, n1_g, n1_b, x, H, W, num_heads, sr_ratio, cross):
    B, N, C = x.shape
    d = C // num_heads
    scale = d ** (-0.5)
    x2 = x.reshape(B * N, C)
    if sr_ratio > 1:
        # norm1(x) is needed as an image for the sr conv -> standalone LN here.
        xn = pallas_layernorm(x2, n1_g, n1_b, 1e-6)
        q = pallas_matmul(xn, p['q_w'].T, p['q_b'])
        xs, Hs, Ws = conv2d_nhwc(xn.reshape(B, H, W, C), p['sr_w'], p['sr_b'],
                                 sr_ratio, 0)
        # sr LayerNorm fused into the kv projection prologue.
        kv = pallas_matmul(xs, p['kv_w'].T, p['kv_b'],
                           ln_gamma=p['srnorm_g'], ln_beta=p['srnorm_b'],
                           ln_eps=1e-5)
        Nk = Hs * Ws
    else:
        # norm1 fused into one lane-denser q+kv projection (output width 3C).
        qkv_w = jnp.concatenate([p['q_w'], p['kv_w']], axis=0)     # (3C, C)
        qkv_b = jnp.concatenate([p['q_b'], p['kv_b']], axis=0)
        qkv = pallas_matmul(x2, qkv_w.T, qkv_b,
                            ln_gamma=n1_g, ln_beta=n1_b, ln_eps=1e-6)
        q = qkv[:, :C]
        kv = qkv[:, C:]
        Nk = N
    q = q.reshape(B, N, num_heads, d).transpose(0, 2, 1, 3)        # (B,h,N,d)
    kv = kv.reshape(B, Nk, 2, num_heads, d).transpose(2, 0, 3, 1, 4)
    k, v = kv[0], kv[1]
    if cross:
        mb = B // 2                                  # q1<->k2/v2, q2<->k1/v1
        k = jnp.concatenate([k[mb:], k[:mb]], axis=0)
        v = jnp.concatenate([v[mb:], v[:mb]], axis=0)
    o = pallas_attention(q, k, v, scale)             # (B, h, N, d)
    o = o.transpose(0, 2, 1, 3).reshape(B * N, C)
    o = pallas_matmul(o, p['proj_w'].T, p['proj_b'])
    return o.reshape(B, N, C)


def mlp_forward(p, n2_g, n2_b, x, H, W):
    B, N, C = x.shape
    hidden = p['fc1_w'].shape[0]
    # norm2 fused into the fc1 matmul prologue.
    h = pallas_matmul(x.reshape(B * N, C), p['fc1_w'].T, p['fc1_b'],
                      ln_gamma=n2_g, ln_beta=n2_b, ln_eps=1e-6)
    # depthwise 3x3 conv + bias + GELU fused in one row-tiled kernel.
    h = pallas_dwconv_gelu(h.reshape(B, H, W, hidden), p['dw_w'], p['dw_b'])
    y = pallas_matmul(h.reshape(B * N, hidden), p['fc2_w'].T, p['fc2_b'])
    return y.reshape(B, N, C)


def block_forward(p, x, H, W, num_heads, sr_ratio, cross):
    x = x + attention_forward(p['attn'], p['norm1_g'], p['norm1_b'], x, H, W,
                              num_heads, sr_ratio, cross)
    x = x + mlp_forward(p['mlp'], p['norm2_g'], p['norm2_b'], x, H, W)
    return x


def attention_block_forward(p, x_nhwc, patch, stride, num_heads, sr_ratio,
                            cross_list):
    x, H, W = patch_embed_forward(p['patch_embed'], x_nhwc, patch, stride)
    for i, bp in enumerate(p['blocks']):
        x = block_forward(bp, x, H, W, num_heads, sr_ratio, cross_list[i])
    B, N, C = x.shape
    x = pallas_layernorm(x.reshape(B * N, C), p['norm_g'], p['norm_b'], 1e-6)
    return x.reshape(B, H, W, C)                     # NHWC


def outconv2_forward(p, x_nhwc):
    B, H, W, _ = x_nhwc.shape
    Cmid = p['conv1_w'].shape[0]
    y, _, _ = conv2d_nhwc(x_nhwc, p['conv1_w'], None, 1, 1)    # (B*H*W, Cmid)
    # TODO(synk): BatchNorm uses batch statistics (training-mode forward); an
    # eval()-mode reference would use running_mean/running_var instead.
    Mrows = B * H * W
    stats = pallas_bn_stats(y)                       # (2, Cmid) f32
    mean = stats[0] / Mrows
    var = stats[1] / Mrows - mean * mean
    scale = p['bn_g'] * jax.lax.rsqrt(var + 1e-5)
    shift = p['bn_b'] - mean * scale
    y = pallas_bn_apply(y, scale, shift)             # BN affine + LeakyReLU
    z, Ho, Wo = conv2d_nhwc(y.reshape(B, H, W, Cmid), p['conv2_w'], None, 1, 1)
    Cout = p['conv2_w'].shape[0]
    return z.reshape(B, Ho, Wo, Cout)


def matchformer_forward(params, x_nchw):
    # public boundary: NCHW in -> NHWC internal
    x = jnp.transpose(x_nchw, (0, 2, 3, 1)).astype(ACT_DT)
    outs = []
    for s in range(4):
        x = attention_block_forward(params['ab'][s], x, PATCH[s], STRIDE[s],
                                    NUM_HEADS[s], SR_RATIOS[s], CROSS[s])
        outs.append(x)
    out1, out2, out3, out4 = outs

    c4_out = conv1x1_nhwc(out4, params['layer4_outconv_w'])
    H, W = out3.shape[1], out3.shape[2]
    c4_out_2x = bilinear_upsample_nhwc(c4_out, H, W)

    c3_out = conv1x1_nhwc(out3, params['layer3_outconv_w'])
    H, W = out2.shape[1], out2.shape[2]
    c3_out = outconv2_forward(params['layer3_outconv2'], c3_out + c4_out_2x)
    c3_out_2x = bilinear_upsample_nhwc(c3_out, H, W)

    c2_out = conv1x1_nhwc(out2, params['layer2_outconv_w'])
    H, W = out1.shape[1], out1.shape[2]
    c2_out = outconv2_forward(params['layer2_outconv2'], c2_out + c3_out_2x)
    c2_out_2x = bilinear_upsample_nhwc(c2_out, H, W)

    c1_out = conv1x1_nhwc(out1, params['layer1_outconv_w'])
    c1_out = outconv2_forward(params['layer1_outconv2'], c1_out + c2_out_2x)

    # public boundary: NHWC -> NCHW, f32
    c2_nchw = jnp.transpose(c2_out, (0, 3, 1, 2)).astype(jnp.float32)
    c1_nchw = jnp.transpose(c1_out, (0, 3, 1, 2)).astype(jnp.float32)
    return c2_nchw, c1_nchw


# ----------------------------- parameter init ------------------------------
class KeyGen:
    def __init__(self, seed=0):
        self._key = jax.random.PRNGKey(seed)
        self._i = 0

    def __call__(self):
        self._i += 1
        return jax.random.fold_in(self._key, self._i)


def _linear(kg, in_f, out_f, bias=True):
    w = 0.02 * jax.random.normal(kg(), (out_f, in_f), jnp.float32)
    b = jnp.zeros((out_f,), jnp.float32) if bias else None
    return w, b


def _conv(kg, cout, cin_per_group, kh, kw, groups=1, bias=True):
    fan_out = kh * kw * cout // groups
    w = math.sqrt(2.0 / fan_out) * jax.random.normal(
        kg(), (cout, cin_per_group, kh, kw), jnp.float32)
    b = jnp.zeros((cout,), jnp.float32) if bias else None
    return w, b


def _ln(dim):
    return jnp.ones((dim,), jnp.float32), jnp.zeros((dim,), jnp.float32)


def make_params(kg, in_chans=1):
    params = {'ab': []}
    chans = in_chans
    for s in range(4):
        dim = EMBED_DIMS[s]
        pe = {}
        pe['proj_w'], pe['proj_b'] = _conv(kg, dim, chans, PATCH[s], PATCH[s])
        pe['pa_w'], pe['pa_b'] = _conv(kg, dim, 1, 3, 3, groups=dim)
        pe['norm_g'], pe['norm_b'] = _ln(dim)
        blocks = []
        for _ in range(DEPTHS):
            bp = {}
            bp['norm1_g'], bp['norm1_b'] = _ln(dim)
            at = {}
            at['q_w'], at['q_b'] = _linear(kg, dim, dim)
            at['kv_w'], at['kv_b'] = _linear(kg, dim, 2 * dim)
            at['proj_w'], at['proj_b'] = _linear(kg, dim, dim)
            if SR_RATIOS[s] > 1:
                at['sr_w'], at['sr_b'] = _conv(kg, dim, dim,
                                               SR_RATIOS[s], SR_RATIOS[s])
                at['srnorm_g'], at['srnorm_b'] = _ln(dim)
            bp['attn'] = at
            bp['norm2_g'], bp['norm2_b'] = _ln(dim)
            hidden = dim * 4
            mp = {}
            mp['fc1_w'], mp['fc1_b'] = _linear(kg, dim, hidden)
            mp['dw_w'], mp['dw_b'] = _conv(kg, hidden, 1, 3, 3, groups=hidden)
            mp['fc2_w'], mp['fc2_b'] = _linear(kg, hidden, dim)
            bp['mlp'] = mp
            blocks.append(bp)
        ab = {'patch_embed': pe, 'blocks': blocks}
        ab['norm_g'], ab['norm_b'] = _ln(dim)
        params['ab'].append(ab)
        chans = dim

    def outconv2_params(cmid, cout):
        q = {}
        q['conv1_w'], _ = _conv(kg, cmid, cmid, 3, 3, bias=False)
        q['bn_g'], q['bn_b'] = _ln(cmid)
        q['conv2_w'], _ = _conv(kg, cout, cmid, 3, 3, bias=False)
        return q

    e = EMBED_DIMS
    params['layer4_outconv_w'], _ = _conv(kg, e[3], e[3], 1, 1, bias=False)
    params['layer3_outconv_w'], _ = _conv(kg, e[3], e[2], 1, 1, bias=False)
    params['layer3_outconv2'] = outconv2_params(e[3], e[2])
    params['layer2_outconv_w'], _ = _conv(kg, e[2], e[1], 1, 1, bias=False)
    params['layer2_outconv2'] = outconv2_params(e[2], e[1])
    params['layer1_outconv_w'], _ = _conv(kg, e[1], e[0], 1, 1, bias=False)
    params['layer1_outconv2'] = outconv2_params(e[1], e[0])
    return params


# ----------------------------------- main -----------------------------------
if __name__ == "__main__":
    kg = KeyGen(0)
    params = make_params(kg, in_chans=1)
    x = jax.random.normal(jax.random.PRNGKey(0), (2, 1, 32, 32), jnp.float32)

    c2_out, c1_out = matchformer_forward(params, x)
    jax.block_until_ready((c2_out, c1_out))

    assert c2_out.shape == (2, EMBED_DIMS[1], 4, 4), c2_out.shape
    assert c1_out.shape == (2, EMBED_DIMS[0], 8, 8), c1_out.shape
    assert bool(jnp.all(jnp.isfinite(c2_out))) and bool(jnp.all(jnp.isfinite(c1_out)))
    print("KERNEL_OK")
</pallas_src>

<mosaic_0001>
module attributes {stable_mosaic.version = 11 : i64} {
  func.func @_mm_kernel(%arg0: i32, %arg1: memref<128x49xbf16, #tpu.memory_space<vmem>>, %arg2: memref<49x32xbf16, #tpu.memory_space<vmem>>, %arg3: memref<1x32xf32, #tpu.memory_space<vmem>>, %arg4: memref<1x49xf32, #tpu.memory_space<vmem>>, %arg5: memref<1x49xf32, #tpu.memory_space<vmem>>, %arg6: memref<128x32xbf16, #tpu.memory_space<vmem>>) attributes {dimension_semantics = [#tpu.dimension_semantics<parallel>], iteration_bounds = array<i64: 1>, scalar_prefetch = 0 : i64, scratch_operands = 0 : i64, tpu.core_type = #tpu.core_type<tc>, window_params = [{transform_indices = @transform_0, window_bounds = array<i64: 128, 49>}, {pipeline_mode = #tpu.pipeline_mode<synchronous>, transform_indices = @transform_1, window_bounds = array<i64: 49, 32>}, {pipeline_mode = #tpu.pipeline_mode<synchronous>, transform_indices = @transform_2, window_bounds = array<i64: 1, 32>}, {pipeline_mode = #tpu.pipeline_mode<synchronous>, transform_indices = @transform_3, window_bounds = array<i64: 1, 49>}, {pipeline_mode = #tpu.pipeline_mode<synchronous>, transform_indices = @transform_4, window_bounds = array<i64: 1, 49>}, {transform_indices = @transform_5, window_bounds = array<i64: 128, 32>}]} {
    %c0 = arith.constant 0 : index
    %c0_0 = arith.constant 0 : index
    %0 = vector.load %arg1[%c0, %c0_0] : memref<128x49xbf16, #tpu.memory_space<vmem>>, vector<128x49xbf16>
    %c0_1 = arith.constant 0 : index
    %c0_2 = arith.constant 0 : index
    %1 = vector.load %arg2[%c0_1, %c0_2] : memref<49x32xbf16, #tpu.memory_space<vmem>>, vector<49x32xbf16>
    %cst = arith.constant dense<0.000000e+00> : vector<128x32xf32>
    %2 = tpu.matmul %0, %1, %cst {dimension_numbers = #tpu.dot_dimension_numbers<[1], [0], [0], [1], [0, 0, 1, 1], [], []>} : vector<128x49xbf16>, vector<49x32xbf16>, vector<128x32xf32> -> vector<128x32xf32>
    %c0_3 = arith.constant 0 : index
    %c0_4 = arith.constant 0 : index
    %3 = vector.load %arg3[%c0_3, %c0_4] : memref<1x32xf32, #tpu.memory_space<vmem>>, vector<1x32xf32>
    %4 = vector.broadcast %3 : vector<1x32xf32> to vector<128x32xf32>
    %5 = arith.addf %2, %4 : vector<128x32xf32>
    %6 = arith.truncf %5 : vector<128x32xf32> to vector<128x32xbf16>
    %c0_5 = arith.constant 0 : index
    %c0_6 = arith.constant 0 : index
    %7 = vector.load %arg6[%c0_5, %c0_6] : memref<128x32xbf16, #tpu.memory_space<vmem>>, vector<128x32xbf16>
    tpu.vector_store %arg6[%c0_5, %c0_6], %6 {strides = array<i32>} : memref<128x32xbf16, #tpu.memory_space<vmem>>, vector<128x32xbf16>,
    return
  }
  func.func @transform_0(%arg0: i32) -> (i32, i32) {
    %c0_i32 = arith.constant 0 : i32
    %c0_i32_0 = arith.constant 0 : i32
    return %arg0, %c0_i32 : i32, i32
  }
  func.func @transform_1(%arg0: i32) -> (i32, i32) {
    %c0_i32 = arith.constant 0 : i32
    %c0_i32_0 = arith.constant 0 : i32
    %c0_i32_1 = arith.constant 0 : i32
    return %c0_i32, %c0_i32_0 : i32, i32
  }
  func.func @transform_2(%arg0: i32) -> (i32, i32) {
    %c0_i32 = arith.constant 0 : i32
    %c0_i32_0 = arith.constant 0 : i32
    %c0_i32_1 = arith.constant 0 : i32
    return %c0_i32, %c0_i32_0 : i32, i32
  }
  func.func @transform_3(%arg0: i32) -> (i32, i32) {
    %c0_i32 = arith.constant 0 : i32
    %c0_i32_0 = arith.constant 0 : i32
    %c0_i32_1 = arith.constant 0 : i32
    return %c0_i32, %c0_i32_0 : i32, i32
  }
  func.func @transform_4(%arg0: i32) -> (i32, i32) {
    %c0_i32 = arith.constant 0 : i32
    %c0_i32_0 = arith.constant 0 : i32
    %c0_i32_1 = arith.constant 0 : i32
    return %c0_i32, %c0_i32_0 : i32, i32
  }
  func.func @transform_5(%arg0: i32) -> (i32, i32) {
    %c0_i32 = arith.constant 0 : i32
    %c0_i32_0 = arith.constant 0 : i32
    return %arg0, %c0_i32 : i32, i32
  }
}

</mosaic_0001>

<llo_original>
// kernel: tpu_custom_call.1
$region0: #{tpu_custom_call.1}
  #allocation0 [shape = 'u32[]', space=smem, size = 0x4, offset = 0x4, fixed_abs, tag = 'smem constant byte address 0x4 - core index']
  #allocation1 [shape = 'u32[144,128]{1,0:T(1,128)}', space=vmem, size = 0x12000, scoped, tag = 'internal scratch']
  %s0 = inlined_call_operand.vmem [shape: bf16[128,49], index: 0, kind: input, shape index: {}]
  %s1 = inlined_call_operand.vmem [shape: bf16[49,32], index: 1, kind: input, shape index: {}]
  %s2 = inlined_call_operand.vmem [shape: f32[1,32], index: 2, kind: input, shape index: {}]
  %s3 = inlined_call_operand.vmem [shape: f32[1,49], index: 3, kind: input, shape index: {}]
  %s4 = inlined_call_operand.vmem [shape: f32[1,49], index: 4, kind: input, shape index: {}]
  %s5 = inlined_call_operand.vmem [shape: bf16[128,32], index: 5, kind: output, shape index: {}]
  %s6 = sld [smem:[#allocation0]]
  $region30: #{tpu_custom_call.1} parent=0
    _
  %s8 = ssub.s32 1, %s6
  %s9 = scalar_select 0, %s8, %s6
  // Predicated region
  $region2: #{tpu_custom_call.1} parent=0 // pred_check
    _
  $region3: #{tpu_custom_call.1} parent=0 // pred_check_branch
    %11 = sbr.rel (0) target = $region5
  $region4: #{tpu_custom_call.1} parent=0 // pred_region
    _
  $region5: #{tpu_custom_call.1} parent=0 // pred_fallthru
    _
  // Predicated region
  $region6: #{tpu_custom_call.1} parent=0 // pred_check
    _
  $region7: #{tpu_custom_call.1} parent=0 // pred_check_branch
    %13 = sbr.rel (0) target = $region9
  $region8: #{tpu_custom_call.1} parent=0 // pred_region
    _
  $region9: #{tpu_custom_call.1} parent=0 // pred_fallthru
    _
  // Predicated region
  $region10: #{tpu_custom_call.1} parent=0 // pred_check
    _
  $region11: #{tpu_custom_call.1} parent=0 // pred_check_branch
    %15 = sbr.rel (0) target = $region13
  $region12: #{tpu_custom_call.1} parent=0 // pred_region
    _
  $region13: #{tpu_custom_call.1} parent=0 // pred_fallthru
    _
  // Predicated region
  $region14: #{tpu_custom_call.1} parent=0 // pred_check
    _
  $region15: #{tpu_custom_call.1} parent=0 // pred_check_branch
    %17 = sbr.rel (0) target = $region17
  $region16: #{tpu_custom_call.1} parent=0 // pred_region
    _
  $region17: #{tpu_custom_call.1} parent=0 // pred_fallthru
    _
  // Predicated region
  $region18: #{tpu_custom_call.1} parent=0 // pred_check
    _
  $region19: #{tpu_custom_call.1} parent=0 // pred_check_branch
    %19 = sbr.rel (0) target = $region21
  $region20: #{tpu_custom_call.1} parent=0 // pred_region
    _
  $region21: #{tpu_custom_call.1} parent=0 // pred_fallthru
    _
  %v21 = vld [vmem:[%s0] sm:$0xf]
  %v22 = vld [vmem:[%s0 + $0x4] sm:$0xf]
  %v23 = vld [vmem:[%s0 + $0x8] sm:$0xf]
  %v24 = vld [vmem:[%s0 + $0xc] sm:$0xf]
  %v25 = vld [vmem:[%s0 + $0x10] sm:$0xf]
  %v26 = vld [vmem:[%s0 + $0x14] sm:$0xf]
  %v27 = vld [vmem:[%s0 + $0x18] sm:$0xf]
  %v28 = vld [vmem:[%s0 + $0x1c] sm:$0xf]
  %v29 = vld [vmem:[%s0 + $0x20] sm:$0xf]
  %v30 = vld [vmem:[%s0 + $0x24] sm:$0xf]
  %v31 = vld [vmem:[%s0 + $0x28] sm:$0xf]
  %v32 = vld [vmem:[%s0 + $0x2c] sm:$0xf]
  %v33 = vld [vmem:[%s0 + $0x30] sm:$0xf]
  %v34 = vld [vmem:[%s0 + $0x34] sm:$0xf]
  %v35 = vld [vmem:[%s0 + $0x38] sm:$0xf]
  %v36 = vld [vmem:[%s0 + $0x3c] sm:$0xf]
  %v37 = vld [vmem:[%s1] sm:$0xf]
  %v38 = vld [vmem:[%s1 + $0x4] sm:$0xf]
  %v39 = vld [vmem:[%s1 + $0x8] sm:$0xf]
  %v40 = vld [vmem:[%s1 + $0xc] sm:$0xf]
  %v41 = vld [vmem:[%s1 + $0x10] sm:$0xf]
  %v42 = vld [vmem:[%s1 + $0x14] sm:$0xf]
  %v43 = vld [vmem:[%s1 + $0x18] sm:$0x1]
  %v44 = vld [vmem:[%s2] sm:$0x1]
  %v46 = vlaneseq
  %v47 = vshrl.u32 %v46, 7
  %v48 = vsub.s32 0, %v47
  %v49 = vrot.slane %v44, %v48
  %v67 = vunpack.c.l.b16 %v21
  %v68 = vunpack.c.l.b16 %v22
  %v69 = vunpack.c.l.b16 %v23
  %v70 = vunpack.c.l.b16 %v24
  %v71 = vunpack.c.l.b16 %v25
  %v72 = vunpack.c.l.b16 %v26
  %v73 = vunpack.c.l.b16 %v27
  %v74 = vunpack.c.l.b16 %v28
  %v75 = vunpack.c.l.b16 %v29
  %v76 = vunpack.c.l.b16 %v30
  %v77 = vunpack.c.l.b16 %v31
  %v78 = vunpack.c.l.b16 %v32
  %v79 = vunpack.c.l.b16 %v33
  %v80 = vunpack.c.l.b16 %v34
  %v81 = vunpack.c.l.b16 %v35
  %v82 = vunpack.c.l.b16 %v36
  %v83 = vpack.c.b16 %v68, %v67
  %v84 = vpack.c.b16 %v70, %v69
  %v85 = vpack.c.b16 %v72, %v71
  %v86 = vpack.c.b16 %v74, %v73
  %v87 = vpack.c.b16 %v76, %v75
  %v88 = vpack.c.b16 %v78, %v77
  %v89 = vpack.c.b16 %v80, %v79
  %v90 = vpack.c.b16 %v82, %v81
  %v98 = vunpack.c.l.b16 %v37
  %v99 = vunpack.c.l.b16 %v38
  %v100 = vunpack.c.l.b16 %v39
  %v101 = vunpack.c.l.b16 %v40
  %v102 = vunpack.c.l.b16 %v41
  %v103 = vunpack.c.l.b16 %v42
  %v104 = vunpack.c.l.b16 %v43
  %v105 = vpack.c.b16 %v99, %v98
  %v106 = vpack.c.b16 %v101, %v100
  %v107 = vpack.c.b16 %v103, %v102
  %v108 = vpack.c.b16 %v104, %v104
  %vm112 = vcmask 400384
  %v114 = vsel %vm112, %v83, 0
  %v117 = vsel %vm112, %v84, 0
  %v120 = vsel %vm112, %v85, 0
  %v123 = vsel %vm112, %v86, 0
  %v126 = vsel %vm112, %v87, 0
  %v129 = vsel %vm112, %v88, 0
  %v132 = vsel %vm112, %v89, 0
  %v135 = vsel %vm112, %v90, 0
  %vm137 = vcmask 1040384
  %v138 = vsel 0, 4294967295, 65535
  %v139 = vsel %vm137, %v138, 0
  %v141 = vand.u32 %v108, %v139
  %143 = vmatprep.subr.bf16.mxu0 0
  %144 = vmatpush1.bf16.msra.mxu0 %v105
  %145 = vmatprep.subr.bf16.mxu0 0
  %146 = vmatpush1.bf16.msra.mxu0 %v106
  %147 = vmatprep.subr.bf16.mxu0 0
  %148 = vmatpush1.bf16.msra.mxu0 %v107
  %149 = vmatprep.subr.bf16.mxu0 0
  %150 = vmatpush1.bf16.msra.mxu0 %v141
  %151 = vmatprep.subr.bf16.mxu0 0
  %152 = vmatpush1.bf16.msra.mxu0 0
  %153 = vmatprep.subr.bf16.mxu0 0
  %154 = vmatpush1.bf16.msra.mxu0 0
  %155 = vmatprep.subr.bf16.mxu0 0
  %156 = vmatpush1.bf16.msra.mxu0 0
  %157 = vmatprep.subr.bf16.mxu0 0
  %158 = vmatpush1.bf16.msra.mxu0 0
  %159 = vmatprep.subr.bf16.mxu0 0
  %160 = vmatpush1.bf16.msra.mxu0 0
  %161 = vmatprep.subr.bf16.mxu0 0
  %162 = vmatpush1.bf16.msra.mxu0 0
  %163 = vmatprep.subr.bf16.mxu0 0
  %164 = vmatpush1.bf16.msra.mxu0 0
  %165 = vmatprep.subr.bf16.mxu0 0
  %166 = vmatpush1.bf16.msra.mxu0 0
  %167 = vmatprep.subr.bf16.mxu0 0
  %168 = vmatpush1.bf16.msra.mxu0 0
  %169 = vmatprep.subr.bf16.mxu0 0
  %170 = vmatpush1.bf16.msra.mxu0 0
  %171 = vmatprep.subr.bf16.mxu0 0
  %172 = vmatpush1.bf16.msra.mxu0 0
  %173 = vmatprep.subr.bf16.mxu0 0
  %174 = vmatpush1.bf16.msra.mxu0 0
  %175 = vmatprep.mubr.bf16.mxu0 0
  %176 = vmatmul.mubr.bf16.gmra.mrb[0].mxu0 %v114
  %v177 = vpop.f32.mrb[0].mxu0
  %v178 = vadd.f32 %v49, %v177
  %v179 = vpop.f32.mrb[0].mxu0
  %v180 = vpop.f32.mrb[0].mxu0
  %v181 = vadd.f32 %v49, %v180
  %v182 = vpop.f32.mrb[0].mxu0
  %183 = vmatprep.mubr.bf16.mxu0 0
  %184 = vmatmul.mubr.bf16.gmra.mrb[0].mxu0 %v117
  %v185 = vpop.f32.mrb[0].mxu0
  %v186 = vadd.f32 %v49, %v185
  %v187 = vpop.f32.mrb[0].mxu0
  %v188 = vpop.f32.mrb[0].mxu0
  %v189 = vadd.f32 %v49, %v188
  %v190 = vpop.f32.mrb[0].mxu0
  %191 = vmatprep.mubr.bf16.mxu0 0
  %192 = vmatmul.mubr.bf16.gmra.mrb[0].mxu0 %v120
  %v193 = vpop.f32.mrb[0].mxu0
  %v194 = vadd.f32 %v49, %v193
  %v195 = vpop.f32.mrb[0].mxu0
  %v196 = vpop.f32.mrb[0].mxu0
  %v197 = vadd.f32 %v49, %v196
  %v198 = vpop.f32.mrb[0].mxu0
  %199 = vmatprep.mubr.bf16.mxu0 0
  %200 = vmatmul.mubr.bf16.gmra.mrb[0].mxu0 %v123
  %v201 = vpop.f32.mrb[0].mxu0
  %v202 = vadd.f32 %v49, %v201
  %v203 = vpop.f32.mrb[0].mxu0
  %v204 = vpop.f32.mrb[0].mxu0
  %v205 = vadd.f32 %v49, %v204
  %v206 = vpop.f32.mrb[0].mxu0
  %207 = vmatprep.mubr.bf16.mxu0 0
  %208 = vmatmul.mubr.bf16.gmra.mrb[0].mxu0 %v126
  %v209 = vpop.f32.mrb[0].mxu0
  %v210 = vadd.f32 %v49, %v209
  %v211 = vpop.f32.mrb[0].mxu0
  %v212 = vpop.f32.mrb[0].mxu0
  %v213 = vadd.f32 %v49, %v212
  %v214 = vpop.f32.mrb[0].mxu0
  %215 = vmatprep.mubr.bf16.mxu0 0
  %216 = vmatmul.mubr.bf16.gmra.mrb[0].mxu0 %v129
  %v217 = vpop.f32.mrb[0].mxu0
  %v218 = vadd.f32 %v49, %v217
  %v219 = vpop.f32.mrb[0].mxu0
  %v220 = vpop.f32.mrb[0].mxu0
  %v221 = vadd.f32 %v49, %v220
  %v222 = vpop.f32.mrb[0].mxu0
  %223 = vmatprep.mubr.bf16.mxu0 0
  %224 = vmatmul.mubr.bf16.gmra.mrb[0].mxu0 %v132
  %v225 = vpop.f32.mrb[0].mxu0
  %v226 = vadd.f32 %v49, %v225
  %v227 = vpop.f32.mrb[0].mxu0
  %v228 = vpop.f32.mrb[0].mxu0
  %v229 = vadd.f32 %v49, %v228
  %v230 = vpop.f32.mrb[0].mxu0
  %231 = vmatprep.mubr.bf16.mxu0 0
  %232 = vmatmul.mubr.bf16.gmra.mrb[0].mxu0 %v135
  %v233 = vpop.f32.mrb[0].mxu0
  %v234 = vadd.f32 %v49, %v233
  %v235 = vpop.f32.mrb[0].mxu0
  %v236 = vpop.f32.mrb[0].mxu0
  %v237 = vadd.f32 %v49, %v236
  %v238 = vpop.f32.mrb[0].mxu0
  %239 = vdwg.mxu0
  %v240 = vpack.c.bf16 %v181, %v178
  %v241 = vpack.c.bf16 %v189, %v186
  %v242 = vpack.c.bf16 %v197, %v194
  %v243 = vpack.c.bf16 %v205, %v202
  %v244 = vpack.c.bf16 %v213, %v210
  %v245 = vpack.c.bf16 %v221, %v218
  %v246 = vpack.c.bf16 %v229, %v226
  %v247 = vpack.c.bf16 %v237, %v234
  %v256 = vunpack.c.l.b16 %v240
  %v257 = vunpack.c.h.b16 %v240
  %v258 = vunpack.c.l.b16 %v241
  %v259 = vunpack.c.h.b16 %v241
  %v260 = vunpack.c.l.b16 %v242
  %v261 = vunpack.c.h.b16 %v242
  %v262 = vunpack.c.l.b16 %v243
  %v263 = vunpack.c.h.b16 %v243
  %v264 = vunpack.c.l.b16 %v244
  %v265 = vunpack.c.h.b16 %v244
  %v266 = vunpack.c.l.b16 %v245
  %v267 = vunpack.c.h.b16 %v245
  %v268 = vunpack.c.l.b16 %v246
  %v269 = vunpack.c.h.b16 %v246
  %v270 = vunpack.c.l.b16 %v247
  %v271 = vunpack.c.h.b16 %v247
  %v272 = vpack.c.b16 %v256, %v256
  %v273 = vpack.c.b16 %v257, %v257
  %v274 = vpack.c.b16 %v258, %v258
  %v275 = vpack.c.b16 %v259, %v259
  %v276 = vpack.c.b16 %v260, %v260
  %v277 = vpack.c.b16 %v261, %v261
  %v278 = vpack.c.b16 %v262, %v262
  %v279 = vpack.c.b16 %v263, %v263
  %v280 = vpack.c.b16 %v264, %v264
  %v281 = vpack.c.b16 %v265, %v265
  %v282 = vpack.c.b16 %v266, %v266
  %v283 = vpack.c.b16 %v267, %v267
  %v284 = vpack.c.b16 %v268, %v268
  %v285 = vpack.c.b16 %v269, %v269
  %v286 = vpack.c.b16 %v270, %v270
  %v287 = vpack.c.b16 %v271, %v271
  %vm304 = vcmask 257024
  %305 = vst.msk [vmem:[%s5] sm:$0xf] %vm304, %v272
  %306 = vst.msk [vmem:[%s5 + $0x4] sm:$0xf] %vm304, %v273
  %307 = vst.msk [vmem:[%s5 + $0x8] sm:$0xf] %vm304, %v274
  %308 = vst.msk [vmem:[%s5 + $0xc] sm:$0xf] %vm304, %v275
  %309 = vst.msk [vmem:[%s5 + $0x10] sm:$0xf] %vm304, %v276
  %310 = vst.msk [vmem:[%s5 + $0x14] sm:$0xf] %vm304, %v277
  %311 = vst.msk [vmem:[%s5 + $0x18] sm:$0xf] %vm304, %v278
  %312 = vst.msk [vmem:[%s5 + $0x1c] sm:$0xf] %vm304, %v279
  %313 = vst.msk [vmem:[%s5 + $0x20] sm:$0xf] %vm304, %v280
  %314 = vst.msk [vmem:[%s5 + $0x24] sm:$0xf] %vm304, %v281
  %315 = vst.msk [vmem:[%s5 + $0x28] sm:$0xf] %vm304, %v282
  %316 = vst.msk [vmem:[%s5 + $0x2c] sm:$0xf] %vm304, %v283
  %317 = vst.msk [vmem:[%s5 + $0x30] sm:$0xf] %vm304, %v284
  %318 = vst.msk [vmem:[%s5 + $0x34] sm:$0xf] %vm304, %v285
  %319 = vst.msk [vmem:[%s5 + $0x38] sm:$0xf] %vm304, %v286
  %320 = vst.msk [vmem:[%s5 + $0x3c] sm:$0xf] %vm304, %v287
  // Predicated region
  $region22: #{tpu_custom_call.1} parent=0 // pred_check
    _
  $region23: #{tpu_custom_call.1} parent=0 // pred_check_branch
    %322 = sbr.rel (0) target = $region25
  $region24: #{tpu_custom_call.1} parent=0 // pred_region
    _
  $region25: #{tpu_custom_call.1} parent=0 // pred_fallthru
    _
  // Predicated region
  $region26: #{tpu_custom_call.1} parent=0 // pred_check
    _
  $region27: #{tpu_custom_call.1} parent=0 // pred_check_branch
    %324 = sbr.rel (0) target = $region29
  $region28: #{tpu_custom_call.1} parent=0 // pred_region
    _
  $region29: #{tpu_custom_call.1} parent=0 // pred_fallthru
    _

</llo_original>
